<compile_context>
chip_gen: v7x
topology: tpu7x:2x2x1
jax: 0.10.0
libtpu: 0.0.40
codegen_flags: <defaults>
</compile_context>

<pallas_src>
import functools
import math

import jax
import jax.numpy as jnp
import numpy as np
from jax.experimental import pallas as pl
from jax.experimental.pallas import tpu as pltpu

HALF = 0.5
SCALES_MIN = 0.11
SCALES_MAX = 256.0
SCALES_LEVELS = 64
LIKELIHOOD_BOUND = 1e-9

_LANES = 128
_SUBLANES = 8
_INV_SQRT2 = 0.7071067811865476


def get_scale_table(lo=SCALES_MIN, hi=SCALES_MAX, levels=SCALES_LEVELS):
    return jnp.exp(jnp.linspace(math.log(lo), math.log(hi), levels))


def _round_up(x, m):
    return -(-x // m) * m


def _fast_recip(x):
    # EUP approx reciprocal (separate bundle slot, ~free) + one Newton-Raphson
    # refinement back to ~f32 accuracy; fewer VALU ops than the multi-step
    # Newton a full divide lowers to, and well within the 5e-5 tolerance.
    r = pl.reciprocal(x, approx=True)
    return r * (2.0 - x * r)


def _erf_pos(z):
    # Abramowitz & Stegun 7.1.26 rational approximation, valid for z >= 0,
    # |abs err| < 1.5e-7.  VPU polynomial + one EUP exp + one EUP reciprocal.
    a1, a2, a3, a4, a5 = (0.254829592, -0.284496736, 1.421413741,
                          -1.453152027, 1.061405429)
    p = 0.3275911
    t = _fast_recip(1.0 + p * z)
    poly = ((((a5 * t + a4) * t + a3) * t + a2) * t + a1) * t
    return 1.0 - poly * jnp.exp(-z * z)


def _gaussian_conditional_kernel(sym_ref, scale_ref, out_ref, *,
                                 scale_bound, likelihood_bound):
    # Gaussian symmetry: L(x, s) == L(|x|, s).  With y = |x| the upper erf
    # argument is always >= 0, so it needs no sign/abs/select handling.
    y = jnp.abs(sym_ref[...])
    s = jnp.maximum(scale_ref[...], scale_bound)            # scale LowerBound
    inv = _fast_recip(s) * _INV_SQRT2                       # fold 1/sqrt(2) once
    z_u = (y + HALF) * inv                                  # always >= 0
    z_l = (y - HALF) * inv                                  # sign varies
    erf_u = _erf_pos(z_u)
    erf_l_abs = _erf_pos(jnp.abs(z_l))
    erf_l = jnp.where(z_l >= 0.0, erf_l_abs, -erf_l_abs)
    # Phi(z_u) - Phi(z_l) == 0.5 * (erf(z_u) - erf(z_l)); the "+1" terms cancel.
    like = HALF * (erf_u - erf_l)
    out_ref[...] = jnp.maximum(like, likelihood_bound)      # likelihood LowerBound


def gaussian_conditional_forward(symbols, scales, scale_bound,
                                 likelihood_bound=LIKELIHOOD_BOUND,
                                 tile_rows=2048):
    """Elementwise Gaussian-conditional likelihood via a Pallas TPU kernel."""
    assert symbols.shape == scales.shape, "`symbols` and `scales` must match"
    orig_shape = symbols.shape
    n = int(np.prod(orig_shape))

    sym = symbols.astype(jnp.float32).reshape(-1)
    scl = scales.astype(jnp.float32).reshape(-1)

    # Lane-dense (rows, 128) view.  When n % 128 == 0 the reshape is free;
    # only pad the tail otherwise (extra HBM copy, small tensors only).
    if n % _LANES == 0:
        rows = n // _LANES
        padded = False
    else:
        rows = -(-n // _LANES)
        pad = rows * _LANES - n
        sym = jnp.pad(sym, (0, pad))
        # Padded scales are clamped to scale_bound in the kernel; padded output
        # lanes are sliced off below, so garbage cannot leak into real data.
        scl = jnp.pad(scl, (0, pad), constant_values=1.0)
        padded = True

    sym = sym.reshape(rows, _LANES)
    scl = scl.reshape(rows, _LANES)

    # Row tile: ~1 MiB per input (at the measured HBM-roofline knee); keep at
    # least 2 grid blocks when possible so v7x shards the parallel axis across
    # both TensorCores.  Ragged last block is handled by the cdiv grid.
    if rows <= _SUBLANES:
        tr = rows                                    # block == full array dims
    else:
        tr = min(tile_rows, _round_up(-(-rows // 2), _SUBLANES))
    grid = (-(-rows // tr),)

    kernel = functools.partial(_gaussian_conditional_kernel,
                               scale_bound=float(scale_bound),
                               likelihood_bound=float(likelihood_bound))

    out = pl.pallas_call(
        kernel,
        out_shape=jax.ShapeDtypeStruct((rows, _LANES), jnp.float32),
        grid_spec=pltpu.PrefetchScalarGridSpec(
            num_scalar_prefetch=0,
            grid=grid,
            in_specs=[pl.BlockSpec((tr, _LANES), lambda i: (i, 0)),
                      pl.BlockSpec((tr, _LANES), lambda i: (i, 0))],
            out_specs=pl.BlockSpec((tr, _LANES), lambda i: (i, 0)),
        ),
        compiler_params=pltpu.CompilerParams(
            dimension_semantics=("parallel",)),
    )(sym, scl)

    if padded:
        return out.reshape(-1)[:n].reshape(orig_shape)
    return out.reshape(orig_shape)


def _reference_forward(symbols, scales, scale_bound,
                       likelihood_bound=LIKELIHOOD_BOUND):
    # Plain-JAX reference (exact erfc) for a correctness check of the kernel.
    s = jnp.maximum(scales.astype(jnp.float32), scale_bound)
    const = -(2.0 ** -0.5)
    upper = HALF * jax.scipy.special.erfc(const * (symbols + HALF) / s)
    lower = HALF * jax.scipy.special.erfc(const * (symbols - HALF) / s)
    return jnp.maximum(upper - lower, likelihood_bound)


if __name__ == "__main__":
    # Deterministic "parameter" setup mirroring __init__: scale_table buffer +
    # scale_bound (= min(0.11, scale_table[0])). scale_table itself is only used
    # by update()/build_indexes(), not by forward.
    scale_table = get_scale_table()
    scale_bound = min(0.11, float(scale_table[0]))
    # TODO(synk): update()/compress()/decompress() use an external range coder
    # (ans/range_coder) and pmf_to_quantized_cdf; no Pallas equivalent.
    # NOTE: bf16 I/O would halve HBM traffic on mem-bound v5e/v6e but changes
    # model-facing precision, so it is left to the module owner.

    key = jax.random.PRNGKey(0)

    def check(shape, k):
        k_sym, k_scl = jax.random.split(k)
        symbols = jnp.round(2.0 * jax.random.normal(k_sym, shape, dtype=jnp.float32))
        scales = jax.random.uniform(k_scl, shape, dtype=jnp.float32,
                                    minval=0.01, maxval=2.0)
        out = gaussian_conditional_forward(symbols, scales, scale_bound)
        out = jax.block_until_ready(out)
        ref = _reference_forward(symbols, scales, scale_bound)
        assert out.shape == shape and out.dtype == jnp.float32
        assert np.allclose(np.asarray(out), np.asarray(ref), atol=5e-5, rtol=0)

    k0, k1, k2 = jax.random.split(key, 3)
    check((2, 4, 16, 16), k0)     # NCHW spec shape: n % 128 == 0, unpadded, grid=2
    check((1, 3, 33, 128), k1)    # unpadded, ragged last row-block (99 rows, tr=56)
    check((2, 3, 7, 5), k2)       # n % 128 != 0 -> padded fallback path

    print("KERNEL_OK")
</pallas_src>

<mosaic_0001>
module attributes {stable_mosaic.version = 11 : i64} {
  func.func @_gaussian_conditional_kernel(%arg0: i32, %arg1: memref<8x128xf32, #tpu.memory_space<vmem>>, %arg2: memref<8x128xf32, #tpu.memory_space<vmem>>, %arg3: memref<8x128xf32, #tpu.memory_space<vmem>>) attributes {dimension_semantics = [#tpu.dimension_semantics<parallel>], iteration_bounds = array<i64: 2>, scalar_prefetch = 0 : i64, scratch_operands = 0 : i64, tpu.core_type = #tpu.core_type<tc>, window_params = [{transform_indices = @transform_0, window_bounds = array<i64: 8, 128>}, {transform_indices = @transform_1, window_bounds = array<i64: 8, 128>}, {transform_indices = @transform_2, window_bounds = array<i64: 8, 128>}]} {
    %c0 = arith.constant 0 : index
    %c0_0 = arith.constant 0 : index
    %0 = vector.load %arg1[%c0, %c0_0] : memref<8x128xf32, #tpu.memory_space<vmem>>, vector<8x128xf32>
    %1 = math.absf %0 : vector<8x128xf32>
    %c0_1 = arith.constant 0 : index
    %c0_2 = arith.constant 0 : index
    %2 = vector.load %arg2[%c0_1, %c0_2] : memref<8x128xf32, #tpu.memory_space<vmem>>, vector<8x128xf32>
    %cst = arith.constant 1.100000e-01 : f32
    %3 = vector.broadcast %cst : f32 to vector<8x128xf32>
    %4 = arith.maximumf %2, %3 : vector<8x128xf32>
    %5 = tpu.reciprocal %4 {approx = true} : vector<8x128xf32> -> vector<8x128xf32>
    %6 = arith.mulf %4, %5 : vector<8x128xf32>
    %cst_3 = arith.constant 2.000000e+00 : f32
    %7 = vector.broadcast %cst_3 : f32 to vector<8x128xf32>
    %8 = arith.subf %7, %6 : vector<8x128xf32>
    %9 = arith.mulf %5, %8 : vector<8x128xf32>
    %cst_4 = arith.constant 0.707106769 : f32
    %10 = vector.broadcast %cst_4 : f32 to vector<8x128xf32>
    %11 = arith.mulf %9, %10 : vector<8x128xf32>
    %cst_5 = arith.constant 5.000000e-01 : f32
    %12 = vector.broadcast %cst_5 : f32 to vector<8x128xf32>
    %13 = arith.addf %1, %12 : vector<8x128xf32>
    %14 = arith.mulf %13, %11 : vector<8x128xf32>
    %cst_6 = arith.constant 5.000000e-01 : f32
    %15 = vector.broadcast %cst_6 : f32 to vector<8x128xf32>
    %16 = arith.subf %1, %15 : vector<8x128xf32>
    %17 = arith.mulf %16, %11 : vector<8x128xf32>
    %cst_7 = arith.constant 0.327591091 : f32
    %18 = vector.broadcast %cst_7 : f32 to vector<8x128xf32>
    %19 = arith.mulf %18, %14 : vector<8x128xf32>
    %cst_8 = arith.constant 1.000000e+00 : f32
    %20 = vector.broadcast %cst_8 : f32 to vector<8x128xf32>
    %21 = arith.addf %20, %19 : vector<8x128xf32>
    %22 = tpu.reciprocal %21 {approx = true} : vector<8x128xf32> -> vector<8x128xf32>
    %23 = arith.mulf %21, %22 : vector<8x128xf32>
    %cst_9 = arith.constant 2.000000e+00 : f32
    %24 = vector.broadcast %cst_9 : f32 to vector<8x128xf32>
    %25 = arith.subf %24, %23 : vector<8x128xf32>
    %26 = arith.mulf %22, %25 : vector<8x128xf32>
    %cst_10 = arith.constant 1.06140542 : f32
    %27 = vector.broadcast %cst_10 : f32 to vector<8x128xf32>
    %28 = arith.mulf %27, %26 : vector<8x128xf32>
    %cst_11 = arith.constant -1.45315206 : f32
    %29 = vector.broadcast %cst_11 : f32 to vector<8x128xf32>
    %30 = arith.addf %28, %29 : vector<8x128xf32>
    %31 = arith.mulf %30, %26 : vector<8x128xf32>
    %cst_12 = arith.constant 1.42141378 : f32
    %32 = vector.broadcast %cst_12 : f32 to vector<8x128xf32>
    %33 = arith.addf %31, %32 : vector<8x128xf32>
    %34 = arith.mulf %33, %26 : vector<8x128xf32>
    %cst_13 = arith.constant -0.284496725 : f32
    %35 = vector.broadcast %cst_13 : f32 to vector<8x128xf32>
    %36 = arith.addf %34, %35 : vector<8x128xf32>
    %37 = arith.mulf %36, %26 : vector<8x128xf32>
    %cst_14 = arith.constant 0.254829586 : f32
    %38 = vector.broadcast %cst_14 : f32 to vector<8x128xf32>
    %39 = arith.addf %37, %38 : vector<8x128xf32>
    %40 = arith.mulf %39, %26 : vector<8x128xf32>
    %cst_15 = arith.constant 0.000000e+00 : f32
    %41 = vector.broadcast %cst_15 : f32 to vector<8x128xf32>
    %42 = arith.subf %41, %14 : vector<8x128xf32>
    %43 = arith.mulf %42, %14 : vector<8x128xf32>
    %44 = math.exp %43 : vector<8x128xf32>
    %45 = arith.mulf %40, %44 : vector<8x128xf32>
    %cst_16 = arith.constant 1.000000e+00 : f32
    %46 = vector.broadcast %cst_16 : f32 to vector<8x128xf32>
    %47 = arith.subf %46, %45 : vector<8x128xf32>
    %48 = math.absf %17 : vector<8x128xf32>
    %cst_17 = arith.constant 0.327591091 : f32
    %49 = vector.broadcast %cst_17 : f32 to vector<8x128xf32>
    %50 = arith.mulf %49, %48 : vector<8x128xf32>
    %cst_18 = arith.constant 1.000000e+00 : f32
    %51 = vector.broadcast %cst_18 : f32 to vector<8x128xf32>
    %52 = arith.addf %51, %50 : vector<8x128xf32>
    %53 = tpu.reciprocal %52 {approx = true} : vector<8x128xf32> -> vector<8x128xf32>
    %54 = arith.mulf %52, %53 : vector<8x128xf32>
    %cst_19 = arith.constant 2.000000e+00 : f32
    %55 = vector.broadcast %cst_19 : f32 to vector<8x128xf32>
    %56 = arith.subf %55, %54 : vector<8x128xf32>
    %57 = arith.mulf %53, %56 : vector<8x128xf32>
    %cst_20 = arith.constant 1.06140542 : f32
    %58 = vector.broadcast %cst_20 : f32 to vector<8x128xf32>
    %59 = arith.mulf %58, %57 : vector<8x128xf32>
    %cst_21 = arith.constant -1.45315206 : f32
    %60 = vector.broadcast %cst_21 : f32 to vector<8x128xf32>
    %61 = arith.addf %59, %60 : vector<8x128xf32>
    %62 = arith.mulf %61, %57 : vector<8x128xf32>
    %cst_22 = arith.constant 1.42141378 : f32
    %63 = vector.broadcast %cst_22 : f32 to vector<8x128xf32>
    %64 = arith.addf %62, %63 : vector<8x128xf32>
    %65 = arith.mulf %64, %57 : vector<8x128xf32>
    %cst_23 = arith.constant -0.284496725 : f32
    %66 = vector.broadcast %cst_23 : f32 to vector<8x128xf32>
    %67 = arith.addf %65, %66 : vector<8x128xf32>
    %68 = arith.mulf %67, %57 : vector<8x128xf32>
    %cst_24 = arith.constant 0.254829586 : f32
    %69 = vector.broadcast %cst_24 : f32 to vector<8x128xf32>
    %70 = arith.addf %68, %69 : vector<8x128xf32>
    %71 = arith.mulf %70, %57 : vector<8x128xf32>
    %cst_25 = arith.constant 0.000000e+00 : f32
    %72 = vector.broadcast %cst_25 : f32 to vector<8x128xf32>
    %73 = arith.subf %72, %48 : vector<8x128xf32>
    %74 = arith.mulf %73, %48 : vector<8x128xf32>
    %75 = math.exp %74 : vector<8x128xf32>
    %76 = arith.mulf %71, %75 : vector<8x128xf32>
    %cst_26 = arith.constant 1.000000e+00 : f32
    %77 = vector.broadcast %cst_26 : f32 to vector<8x128xf32>
    %78 = arith.subf %77, %76 : vector<8x128xf32>
    %cst_27 = arith.constant 0.000000e+00 : f32
    %79 = vector.broadcast %cst_27 : f32 to vector<8x128xf32>
    %80 = arith.cmpf oge, %17, %79 : vector<8x128xf32>
    %cst_28 = arith.constant 0.000000e+00 : f32
    %81 = vector.broadcast %cst_28 : f32 to vector<8x128xf32>
    %82 = arith.subf %81, %78 : vector<8x128xf32>
    %83 = arith.select %80, %78, %82 : vector<8x128xi1>, vector<8x128xf32>
    %84 = arith.subf %47, %83 : vector<8x128xf32>
    %cst_29 = arith.constant 5.000000e-01 : f32
    %85 = vector.broadcast %cst_29 : f32 to vector<8x128xf32>
    %86 = arith.mulf %85, %84 : vector<8x128xf32>
    %cst_30 = arith.constant 9.99999971E-10 : f32
    %87 = vector.broadcast %cst_30 : f32 to vector<8x128xf32>
    %88 = arith.maximumf %86, %87 : vector<8x128xf32>
    %c0_31 = arith.constant 0 : index
    %c0_32 = arith.constant 0 : index
    %89 = vector.load %arg3[%c0_31, %c0_32] : memref<8x128xf32, #tpu.memory_space<vmem>>, vector<8x128xf32>
    tpu.vector_store %arg3[%c0_31, %c0_32], %88 {strides = array<i32>} : memref<8x128xf32, #tpu.memory_space<vmem>>, vector<8x128xf32>,
    return
  }
  func.func @transform_0(%arg0: i32) -> (i32, i32) {
    %c0_i32 = arith.constant 0 : i32
    %c0_i32_0 = arith.constant 0 : i32
    return %arg0, %c0_i32 : i32, i32
  }
  func.func @transform_1(%arg0: i32) -> (i32, i32) {
    %c0_i32 = arith.constant 0 : i32
    %c0_i32_0 = arith.constant 0 : i32
    return %arg0, %c0_i32 : i32, i32
  }
  func.func @transform_2(%arg0: i32) -> (i32, i32) {
    %c0_i32 = arith.constant 0 : i32
    %c0_i32_0 = arith.constant 0 : i32
    return %arg0, %c0_i32 : i32, i32
  }
}

</mosaic_0001>

<llo_original>
// kernel: tpu_custom_call.1
$region0: #{tpu_custom_call.1}
  #allocation0 [shape = 'u32[]', space=smem, size = 0x4, offset = 0x4, fixed_abs, tag = 'smem constant byte address 0x4 - core index']
  #allocation1 [shape = 'u32[144,128]{1,0:T(1,128)}', space=vmem, size = 0x12000, scoped, tag = 'internal scratch']
  %s0 = inlined_call_operand.hbm [shape: f32[16,128], index: 0, kind: input, shape index: {}]
  %s1 = inlined_call_operand.hbm [shape: f32[16,128], index: 1, kind: input, shape index: {}]
  %s2 = inlined_call_operand.hbm [shape: f32[16,128], index: 2, kind: output, shape index: {}]
  %s3 = sld [smem:[#allocation0]]
  $region49: #{tpu_custom_call.1} parent=0
    _
  %s5 = ssub.s32 1, %s3
  %s6 = scalar_select 0, %s5, %s3
  $region1: #{tpu_custom_call.1} parent=0
    #allocation2 [shape = 'u8[8192]{0}', space=vmem, size = 0x2000, scoped, tag = 'input window, operand 0']
    #allocation3 [shape = 's32[2]{0}', space=sflag, size = 0x8, scoped, tag = 'scoped memory for tpu_custom_call.1']
    #allocation4 [shape = 's32[2]{0}', space=sflag, size = 0x8, scoped, tag = 'scoped memory for tpu_custom_call.1']
    #allocation5 [shape = 'u8[8192]{0}', space=vmem, size = 0x2000, scoped, tag = 'input window, operand 1']
    #allocation6 [shape = 's32[2]{0}', space=sflag, size = 0x8, scoped, tag = 'scoped memory for tpu_custom_call.1']
    #allocation7 [shape = 'u8[8192]{0}', space=vmem, size = 0x2000, scoped, tag = 'output window, operand 0']
    %7 = vsyncpa [#allocation3], 0
    %s8 = scalar_lea.sflag [#allocation3], 1
    %9 = vsyncpa %s8, 0
    %10 = vsyncpa [#allocation6], 0
    %s11 = scalar_lea.sflag [#allocation6], 1
    %12 = vsyncpa %s11, 0
    %13 = vsyncpa [#allocation4], 0
    %s14 = scalar_lea.sflag [#allocation4], 1
    %15 = vsyncpa %s14, 0
    loop: start=0, step=1, limit=4
    $region2: #{tpu_custom_call.1} parent=1 // loop_pre_header
      _
    $region3: #{tpu_custom_call.1} parent=1 // loop_header
      %s17 = sphi 0, %s21
      %p18 = scmp.ge.s32.totalorder %s17, 4
      %s27 = sphi 0, %s29
      %s30 = sphi 0, %s27
      %s31 = sphi 0, %s30
      %s47 = sphi 0, %s31
      %s53 = sphi 0, %s55
      %s56 = sphi 0, %s53
      %s57 = sphi 0, %s56
      %s73 = sphi 0, %s57
      %s79 = sphi 0, %s81
      %s82 = sphi 0, %s79
      %s83 = sphi 0, %s82
      %s99 = sphi 0, %s83
    $region4: #{tpu_custom_call.1} parent=1 // loop_header_branch
      %20 = sbr.rel (%p18) target = $region8
    $region5: #{tpu_custom_call.1} parent=1 // loop_body
      %s22 = ssub.s32 %s17, 1
      %s23 = ssub.s32 %s17, 2
      %s24 = sadd.s32 %s17, 1
      %s25 = ssub.s32 %s17, %s24
      %p26 = scmp.eq.s32.totalorder %s25, 0
      %s28 = sadd.s32 %s27, 1
      %s29 = scalar_select %p26, %s27, %s28
      %p32 = pneg %p26
      %p33 = scmp.eq.s32.totalorder %s17, 1
      %p34 = por %p32, %p33
      %p35 = scmp.ne.s32.totalorder %s27, %s30
      %p36 = scmp.eq.s32.totalorder %s17, 0
      %p37 = por %p35, %p36
      %p38 = scmp.ne.s32.totalorder %s27, %s30
      %p39 = scmp.eq.s32.totalorder %s22, 1
      %p40 = por %p38, %p39
      %p41 = scmp.ne.s32.totalorder %s30, %s31
      %p42 = scmp.eq.s32.totalorder %s22, 0
      %p43 = por %p41, %p42
      %p44 = scmp.ne.s32.totalorder %s30, %s31
      %p45 = scmp.eq.s32.totalorder %s23, 1
      %p46 = por %p44, %p45
      %p48 = scmp.ne.s32.totalorder %s31, %s47
      %p49 = scmp.eq.s32.totalorder %s23, 0
      %p50 = por %p48, %p49
      %s51 = ssub.s32 %s17, %s24
      %p52 = scmp.eq.s32.totalorder %s51, 0
      %s54 = sadd.s32 %s53, 1
      %s55 = scalar_select %p52, %s53, %s54
      %p58 = pneg %p52
      %p59 = scmp.eq.s32.totalorder %s17, 1
      %p60 = por %p58, %p59
      %p61 = scmp.ne.s32.totalorder %s53, %s56
      %p62 = scmp.eq.s32.totalorder %s17, 0
      %p63 = por %p61, %p62
      %p64 = scmp.ne.s32.totalorder %s53, %s56
      %p65 = scmp.eq.s32.totalorder %s22, 1
      %p66 = por %p64, %p65
      %p67 = scmp.ne.s32.totalorder %s56, %s57
      %p68 = scmp.eq.s32.totalorder %s22, 0
      %p69 = por %p67, %p68
      %p70 = scmp.ne.s32.totalorder %s56, %s57
      %p71 = scmp.eq.s32.totalorder %s23, 1
      %p72 = por %p70, %p71
      %p74 = scmp.ne.s32.totalorder %s57, %s73
      %p75 = scmp.eq.s32.totalorder %s23, 0
      %p76 = por %p74, %p75
      %s77 = ssub.s32 %s17, %s24
      %p78 = scmp.eq.s32.totalorder %s77, 0
      %s80 = sadd.s32 %s79, 1
      %s81 = scalar_select %p78, %s79, %s80
      %p84 = pneg %p78
      %p85 = scmp.eq.s32.totalorder %s17, 1
      %p86 = por %p84, %p85
      %p87 = scmp.ne.s32.totalorder %s79, %s82
      %p88 = scmp.eq.s32.totalorder %s17, 0
      %p89 = por %p87, %p88
      %p90 = scmp.ne.s32.totalorder %s79, %s82
      %p91 = scmp.eq.s32.totalorder %s22, 1
      %p92 = por %p90, %p91
      %p93 = scmp.ne.s32.totalorder %s82, %s83
      %p94 = scmp.eq.s32.totalorder %s22, 0
      %p95 = por %p93, %p94
      %p96 = scmp.ne.s32.totalorder %s82, %s83
      %p97 = scmp.eq.s32.totalorder %s23, 1
      %p98 = por %p96, %p97
      %p100 = scmp.ne.s32.totalorder %s83, %s99
      %p101 = scmp.eq.s32.totalorder %s23, 0
      %p102 = por %p100, %p101
      %p103 = scmp.le.s32.totalorder 1, %s17
      %p104 = scmp.lt.s32.totalorder %s17, 3
      %p105 = pnand %p103, %p104
      %p106 = pneg %p105
      // Predicated region
      $region9: #{tpu_custom_call.1} parent=5 // pred_check
        _
      $region10: #{tpu_custom_call.1} parent=5 // pred_check_branch
        %108 = sbr.rel (%p105) target = $region12
      $region11: #{tpu_custom_call.1} parent=5 // pred_region
        %s109 = ssub.s32 %s17, 1
      $region12: #{tpu_custom_call.1} parent=5 // pred_fallthru
        _
      %p110 = scmp.lt.s32.totalorder %s17, 2
      // Predicated region
      $region13: #{tpu_custom_call.1} parent=5 // pred_check
        %p111 = pneg %p110
      $region14: #{tpu_custom_call.1} parent=5 // pred_check_branch
        %113 = sbr.rel (%p111) target = $region16
      $region15: #{tpu_custom_call.1} parent=5 // pred_region
        // Predicated region
        $region17: #{tpu_custom_call.1} parent=15 // pred_check
          %p114 = pneg %p37
        $region18: #{tpu_custom_call.1} parent=15 // pred_check_branch
          %116 = sbr.rel (%p114) target = $region20
        $region19: #{tpu_custom_call.1} parent=15 // pred_region
          %s117 = sand.u32 %s27, 1
          %s118 = scalar_lea.sflag [#allocation3], %s117
          %s119 = sand.u32 %s27, 1
          %s120 = smul.addr %s119, 8
          %s121 = scalar_lea.vmem [#allocation2], %s120
          %s123 = ssub.s32 128, 128
          %124 = vsyncadd %s118, %s123
          %s125 = smul.addr %s17, 128
          %s126 = scalar_lea.hbm %s0, %s125
          %s128 = sshll.u32 %s121, 4
          %s129 = int_to_ptr.vmem [resolvable:$true] %s128
          %131 = dma.hbm_to_vmem [thread:$0]  %s126, 128, %s129, %s118
        $region20: #{tpu_custom_call.1} parent=15 // pred_fallthru
          _
        // Predicated region
        $region21: #{tpu_custom_call.1} parent=15 // pred_check
          %p132 = pneg %p63
        $region22: #{tpu_custom_call.1} parent=15 // pred_check_branch
          %134 = sbr.rel (%p132) target = $region24
        $region23: #{tpu_custom_call.1} parent=15 // pred_region
          %s135 = sand.u32 %s53, 1
          %s136 = scalar_lea.sflag [#allocation6], %s135
          %s137 = sand.u32 %s53, 1
          %s138 = smul.addr %s137, 8
          %s139 = scalar_lea.vmem [#allocation5], %s138
          %s141 = ssub.s32 128, 128
          %142 = vsyncadd %s136, %s141
          %s143 = smul.addr %s17, 128
          %s144 = scalar_lea.hbm %s1, %s143
          %s146 = sshll.u32 %s139, 4
          %s147 = int_to_ptr.vmem [resolvable:$true] %s146
          %149 = dma.hbm_to_vmem [thread:$0]  %s144, 128, %s147, %s136
        $region24: #{tpu_custom_call.1} parent=15 // pred_fallthru
          _
      $region16: #{tpu_custom_call.1} parent=5 // pred_fallthru
        _
      %p150 = scmp.le.s32.totalorder 1, %s17
      %p151 = scmp.lt.s32.totalorder %s17, 3
      %p152 = pnand %p150, %p151
      %p153 = pneg %p152
      // Predicated region
      $region25: #{tpu_custom_call.1} parent=5 // pred_check
        _
      $region26: #{tpu_custom_call.1} parent=5 // pred_check_branch
        %155 = sbr.rel (%p152) target = $region28
      $region27: #{tpu_custom_call.1} parent=5 // pred_region
        %s156 = ssub.s32 %s17, 1
        %s157 = sand.u32 %s30, 1
        %s158 = scalar_lea.sflag [#allocation3], %s157
        %s159 = sand.u32 %s30, 1
        %s160 = smul.addr %s159, 8
        %s161 = scalar_lea.vmem [#allocation2], %s160
        // Predicated region
        $region29: #{tpu_custom_call.1} parent=27 // pred_check
          %p162 = pneg %p43
        $region30: #{tpu_custom_call.1} parent=27 // pred_check_branch
          %164 = sbr.rel (%p162) target = $region32
        $region31: #{tpu_custom_call.1} parent=27 // pred_region
          %165 = dma.done %s158, 128
        $region32: #{tpu_custom_call.1} parent=27 // pred_fallthru
          _
        %s166 = sand.u32 %s56, 1
        %s167 = scalar_lea.sflag [#allocation6], %s166
        %s168 = sand.u32 %s56, 1
        %s169 = smul.addr %s168, 8
        %s170 = scalar_lea.vmem [#allocation5], %s169
        // Predicated region
        $region33: #{tpu_custom_call.1} parent=27 // pred_check
          %p171 = pneg %p69
        $region34: #{tpu_custom_call.1} parent=27 // pred_check_branch
          %173 = sbr.rel (%p171) target = $region36
        $region35: #{tpu_custom_call.1} parent=27 // pred_region
          %174 = dma.done %s167, 128
        $region36: #{tpu_custom_call.1} parent=27 // pred_fallthru
          _
        %s175 = sand.u32 %s30, 1
        %s176 = scalar_lea.sflag [#allocation3], %s175
        %s177 = sand.u32 %s30, 1
        %s178 = smul.addr %s177, 8
        %s179 = scalar_lea.vmem [#allocation2], %s178
        %p180 = pneg %p43
        %p181 = pneg %p40
        %s182 = sand.u32 %s56, 1
        %s183 = scalar_lea.sflag [#allocation6], %s182
        %s184 = sand.u32 %s56, 1
        %s185 = smul.addr %s184, 8
        %s186 = scalar_lea.vmem [#allocation5], %s185
        %p187 = pneg %p69
        %p188 = pneg %p66
        %p189 = pneg %p95
        %p190 = pneg %p92
        %s191 = sand.u32 %s82, 1
        %s192 = scalar_lea.sflag [#allocation4], %s191
        %s193 = sand.u32 %s82, 1
        %s194 = smul.addr %s193, 8
        %s195 = scalar_lea.vmem [#allocation7], %s194
        %v196 = vld [vmem:[%s161] sm:$0xff]
        %v197 = vand.u32 2147483647, %v196
        %v198 = vld [vmem:[%s170] sm:$0xff]
        %v199 = vmax.f32 %v198, 0.11
        %v200 = vrcp.pop %v199
        %v201 = vmul.f32 %v199, %v200
        %v202 = vsub.f32 2.0, %v201
        %v203 = vmul.f32 %v200, %v202
        %v204 = vmul.f32 %v203, 0.70710677
        %v205 = vadd.f32 %v197, 0.5
        %v206 = vmul.f32 %v205, %v204
        %v207 = vsub.f32 %v197, 0.5
        %v208 = vmul.f32 %v207, %v204
        %v209 = vmul.f32 %v206, 0.3275911
        %v210 = vadd.f32 %v209, 1.0
        %v211 = vrcp.pop %v210
        %v212 = vmul.f32 %v210, %v211
        %v213 = vsub.f32 2.0, %v212
        %v214 = vmul.f32 %v211, %v213
        %v215 = vmul.f32 %v214, 1.0614054
        %v216 = vadd.f32 %v215, -1.4531521
        %v217 = vmul.f32 %v216, %v214
        %v218 = vadd.f32 %v217, 1.4214138
        %v219 = vmul.f32 %v218, %v214
        %v220 = vadd.f32 %v219, -0.28449672
        %v221 = vmul.f32 %v220, %v214
        %v222 = vadd.f32 %v221, 0.2548296
        %v223 = vmul.f32 %v222, %v214
        %v224 = vsub.f32 0.0, %v206
        %v225 = vmul.f32 %v224, %v206
        %v226 = vmul.f32 %v225, 1.442695
        %v227 = vpow.pop %v226
        %v228 = vmul.f32 %v223, %v227
        %v229 = vsub.f32 1.0, %v228
        %v230 = vand.u32 2147483647, %v208
        %v231 = vmul.f32 %v230, 0.3275911
        %v232 = vadd.f32 %v231, 1.0
        %v233 = vrcp.pop %v232
        %v234 = vmul.f32 %v232, %v233
        %v235 = vsub.f32 2.0, %v234
        %v236 = vmul.f32 %v233, %v235
        %v237 = vmul.f32 %v236, 1.0614054
        %v238 = vadd.f32 %v237, -1.4531521
        %v239 = vmul.f32 %v238, %v236
        %v240 = vadd.f32 %v239, 1.4214138
        %v241 = vmul.f32 %v240, %v236
        %v242 = vadd.f32 %v241, -0.28449672
        %v243 = vmul.f32 %v242, %v236
        %v244 = vadd.f32 %v243, 0.2548296
        %v245 = vmul.f32 %v244, %v236
        %v246 = vsub.f32 0.0, %v230
        %v247 = vmul.f32 %v246, %v230
        %v248 = vmul.f32 %v247, 1.442695
        %v249 = vpow.pop %v248
        %v250 = vmul.f32 %v245, %v249
        %v251 = vsub.f32 1.0, %v250
        %vm252 = vcmp.ge.f32.partialorder %v208, 0.0
        %v253 = vsub.f32 0.0, %v251
        %v254 = vsel %vm252, %v251, %v253
        %v255 = vsub.f32 %v229, %v254
        %v256 = vmul.f32 %v255, 0.5
        %v257 = vmax.f32 %v256, 1e-09
        %258 = vst [vmem:[%s195] sm:$0xff] %v257
        %s259 = sand.u32 %s82, 1
        %s260 = scalar_lea.sflag [#allocation4], %s259
        %s261 = sand.u32 %s82, 1
        %s262 = smul.addr %s261, 8
        %s263 = scalar_lea.vmem [#allocation7], %s262
        // Predicated region
        $region37: #{tpu_custom_call.1} parent=27 // pred_check
          %p264 = pneg %p92
        $region38: #{tpu_custom_call.1} parent=27 // pred_check_branch
          %266 = sbr.rel (%p264) target = $region40
        $region39: #{tpu_custom_call.1} parent=27 // pred_region
          %s268 = ssub.s32 128, 128
          %269 = vsyncadd %s260, %s268
          %s270 = smul.addr %s22, 128
          %s271 = scalar_lea.hbm %s2, %s270
          %s273 = sshll.u32 %s263, 4
          %s274 = int_to_ptr.vmem [resolvable:$true] %s273
          %276 = dma.vmem_to_hbm [thread:$0]  %s274, 128, %s271, %s260
        $region40: #{tpu_custom_call.1} parent=27 // pred_fallthru
          _
      $region28: #{tpu_custom_call.1} parent=5 // pred_fallthru
        _
      %p277 = scmp.le.s32.totalorder 2, %s17
      // Predicated region
      $region41: #{tpu_custom_call.1} parent=5 // pred_check
        %p278 = pneg %p277
      $region42: #{tpu_custom_call.1} parent=5 // pred_check_branch
        %280 = sbr.rel (%p278) target = $region44
      $region43: #{tpu_custom_call.1} parent=5 // pred_region
        %s281 = ssub.s32 %s17, 2
        // Predicated region
        $region45: #{tpu_custom_call.1} parent=43 // pred_check
          %p282 = pneg %p98
        $region46: #{tpu_custom_call.1} parent=43 // pred_check_branch
          %284 = sbr.rel (%p282) target = $region48
        $region47: #{tpu_custom_call.1} parent=43 // pred_region
          %s285 = sand.u32 %s83, 1
          %s286 = scalar_lea.sflag [#allocation4], %s285
          %s287 = sand.u32 %s83, 1
          %s288 = smul.addr %s287, 8
          %s289 = scalar_lea.vmem [#allocation7], %s288
          %290 = dma.done %s286, 128
        $region48: #{tpu_custom_call.1} parent=43 // pred_fallthru
          _
      $region44: #{tpu_custom_call.1} parent=5 // pred_fallthru
        _
    $region6: #{tpu_custom_call.1} parent=1 // loop_footer
      %s21 = sadd.s32 1, %s17
    $region7: #{tpu_custom_call.1} parent=1 // loop_footer_branch
      %16 = sbr.rel target = $region3
    $region8: #{tpu_custom_call.1} parent=1 // loop_exit
      _
    %291 = vsyncpa [#allocation3], 1
    %s292 = scalar_lea.sflag [#allocation3], 1
    %293 = vsyncpa %s292, 1
    %294 = vsyncpa [#allocation6], 1
    %s295 = scalar_lea.sflag [#allocation6], 1
    %296 = vsyncpa %s295, 1
    %297 = vsyncpa [#allocation4], 1
    %s298 = scalar_lea.sflag [#allocation4], 1
    %299 = vsyncpa %s298, 1

</llo_original>
